<compile_context>
chip_gen: v7x
topology: tpu7x:2x2x1
jax: 0.10.0
libtpu: 0.0.40
codegen_flags: <defaults>
</compile_context>

<pallas_src>
import functools

import jax
import jax.numpy as jnp
from jax.experimental import pallas as pl
from jax.experimental.pallas import tpu as pltpu


# ----------------------------------------------------------------------------
# Kernel A: one spatial tile per image (tile_m == HW, grid=(N,)).
#   x_ref    : (1, C, HW)          raw pixels (lane axis = spatial)
#   w1_ref   : (C_FEAT_PAD, C)     folded backbone weights (resident)
#   b1_ref   : (C_FEAT_PAD, 1)     folded backbone bias
#   wobj_ref : (C_FEAT_PAD, 1)     objectness weights
#   bobj_ref : (1,)  in SMEM       objectness bias (scalar)
#   wcls_ref : (C_FEAT_PAD, K_PAD) classifier weights
#   bcls_ref : (1, K_PAD)          classifier bias
#   obj_ref  : (1, 1, HW)          lane-dense objectness output
#   cls_ref  : (1, 1, K_PAD)       per-image class logits
# ----------------------------------------------------------------------------
def _rcnn_single_tile_kernel(x_ref, w1_ref, b1_ref, wobj_ref, bobj_ref,
                             wcls_ref, bcls_ref, obj_ref, cls_ref, *, inv_hw):
    x = x_ref[0]                                            # (C, HW)

    # Backbone 1x1 conv (normalization folded) + ReLU on a full-width MXU push.
    feat = jnp.dot(w1_ref[...], x, preferred_element_type=jnp.float32)
    feat = jnp.maximum(feat + b1_ref[...], 0.0)             # (C_FEAT_PAD, HW)

    # Objectness: VPU broadcast-mul + single cross-sublane reduce, lane-dense.
    obj_ref[0] = (jnp.sum(feat * wobj_ref[...], axis=0, keepdims=True)
                  + bobj_ref[0])                            # (1, HW)

    # ROI-head global average pool + classifier (once per image).
    pooled = jnp.sum(feat, axis=1, keepdims=True) * inv_hw  # (C_FEAT_PAD, 1)
    cls_ref[0] = (jnp.sum(wcls_ref[...] * pooled, axis=0, keepdims=True)
                  + bcls_ref[...])                          # (1, K_PAD)


# ----------------------------------------------------------------------------
# Kernel B: tiled spatial axis (grid=(N, T)).  Same refs as above but the
# pixel / objectness tiles are (.., tile_m) and a lane-wise accumulator
#   acc_ref : (C_FEAT_PAD, tile_m)  VMEM scratch
# carries the spatial feature sum; the single cross-lane reduce happens in the
# last-t epilogue only.
# ----------------------------------------------------------------------------
def _rcnn_tiled_kernel(x_ref, w1_ref, b1_ref, wobj_ref, bobj_ref,
                       wcls_ref, bcls_ref, obj_ref, cls_ref, acc_ref,
                       *, inv_hw):
    t = pl.program_id(1)

    @pl.when(t == 0)
    def _():
        acc_ref[...] = jnp.zeros_like(acc_ref)

    x = x_ref[0]                                            # (C, tile_m)
    feat = jnp.dot(w1_ref[...], x, preferred_element_type=jnp.float32)
    feat = jnp.maximum(feat + b1_ref[...], 0.0)             # (C_FEAT_PAD, tile_m)

    obj_ref[0] = (jnp.sum(feat * wobj_ref[...], axis=0, keepdims=True)
                  + bobj_ref[0])                            # (1, tile_m)

    # Pure VPU lane-wise add; no per-step cross-lane reduction.
    acc_ref[...] += feat

    @pl.when(t == pl.num_programs(1) - 1)
    def _():
        pooled = jnp.sum(acc_ref[...], axis=1, keepdims=True) * inv_hw
        cls_ref[0] = (jnp.sum(wcls_ref[...] * pooled, axis=0, keepdims=True)
                      + bcls_ref[...])


def _round_up(x, m):
    return (x + m - 1) // m * m


def _choose_tile_m(hw, cap):
    """Largest multiple-of-128 divisor of hw, capped (hw itself if hw <= cap)."""
    if hw <= cap:
        return hw
    best = 128
    t = 128
    while t <= cap:
        if hw % t == 0:
            best = t
        t += 128
    return best


# ----------------------------------------------------------------------------
# Wrapper: preprocess-fold + fused backbone / proposal / ROI head.
# ----------------------------------------------------------------------------
def dual_rcnn_forward(images_nchw, params, *, tile_m_cap=1024, k_pad=128,
                      use_bf16_pixels=False):
    f32 = jnp.float32
    N, C, H, W = images_nchw.shape
    HW = H * W
    assert HW % 128 == 0, "spatial size must be lane-aligned (HW % 128 == 0)"

    tile_m = _choose_tile_m(HW, tile_m_cap)
    T = HW // tile_m

    # bf16 halves the only large HBM stream (MXU-native on v6e/v7x); post-dot
    # math stays f32 via preferred_element_type.
    in_dtype = jnp.bfloat16 if use_bf16_pixels else f32

    # Free reshape only (contiguous) — no HBM transpose of the image tensor.
    x = images_nchw.reshape(N, C, HW).astype(in_dtype)

    # --- fold (x - mean) / std into the backbone linear layer (tiny, once) ---
    inv_std = 1.0 / params["pixel_std"].astype(f32)                  # (C,)
    mean_over_std = params["pixel_mean"].astype(f32) * inv_std       # (C,)
    w1_t = params["w1"].astype(f32).T                                # (C_feat, C)
    w1_fold = w1_t * inv_std[None, :]
    b1_fold = params["b1"].astype(f32).reshape(-1, 1) \
        - (w1_t @ mean_over_std)[:, None]                            # (C_feat, 1)

    C_feat = w1_t.shape[0]
    K = params["w_cls"].shape[1]
    # Feature axis lives on sublanes everywhere -> pad to 8 only.
    c_feat_pad = _round_up(C_feat, 8)
    assert K <= k_pad

    # --- zero-pad heads (padded feat rows are ReLU(0)=0, padded weights 0) ---
    w1_p = jnp.zeros((c_feat_pad, C), f32).at[:C_feat].set(w1_fold) \
        .astype(in_dtype)
    b1_p = jnp.zeros((c_feat_pad, 1), f32).at[:C_feat].set(b1_fold)
    wobj_p = jnp.zeros((c_feat_pad, 1), f32).at[:C_feat].set(
        params["w_obj"].astype(f32))
    wcls_p = jnp.zeros((c_feat_pad, k_pad), f32).at[:C_feat, :K].set(
        params["w_cls"].astype(f32))
    bcls_p = jnp.zeros((1, k_pad), f32).at[:, :K].set(
        params["b_cls"].astype(f32))
    bobj = params["b_obj"].astype(f32).reshape(1,)                   # SMEM scalar

    if T == 1:
        # Small-HW path: one step per image; no scratch, no reduction bookkeeping.
        kernel = functools.partial(_rcnn_single_tile_kernel, inv_hw=1.0 / HW)
        grid = (N,)
        w_map = lambda n: (0, 0)
        x_spec = pl.BlockSpec((1, C, HW), lambda n: (n, 0, 0))
        obj_spec = pl.BlockSpec((1, 1, HW), lambda n: (n, 0, 0))
        cls_spec = pl.BlockSpec((1, 1, k_pad), lambda n: (n, 0, 0))
        scratch = []
        dims = ("parallel",)
    else:
        kernel = functools.partial(_rcnn_tiled_kernel, inv_hw=1.0 / HW)
        grid = (N, T)
        w_map = lambda n, t: (0, 0)
        x_spec = pl.BlockSpec((1, C, tile_m), lambda n, t: (n, 0, t))
        obj_spec = pl.BlockSpec((1, 1, tile_m), lambda n, t: (n, 0, t))
        cls_spec = pl.BlockSpec((1, 1, k_pad), lambda n, t: (n, 0, 0))
        scratch = [pltpu.VMEM((c_feat_pad, tile_m), jnp.float32)]
        dims = ("parallel", "arbitrary")   # t carries the accumulator

    obj, cls = pl.pallas_call(
        kernel,
        out_shape=(
            jax.ShapeDtypeStruct((N, 1, HW), f32),       # objectness (lane-dense)
            jax.ShapeDtypeStruct((N, 1, k_pad), f32),    # class logits (padded)
        ),
        grid=grid,
        in_specs=[
            x_spec,                                                  # pixels
            pl.BlockSpec((c_feat_pad, C), w_map),                    # w1 (resident)
            pl.BlockSpec((c_feat_pad, 1), w_map),                    # b1
            pl.BlockSpec((c_feat_pad, 1), w_map),                    # w_obj
            pl.BlockSpec(memory_space=pltpu.MemorySpace.SMEM),       # b_obj scalar
            pl.BlockSpec((c_feat_pad, k_pad), w_map),                # w_cls
            pl.BlockSpec((1, k_pad), w_map),                         # b_cls
        ],
        out_specs=(obj_spec, cls_spec),
        scratch_shapes=scratch,
        compiler_params=pltpu.CompilerParams(dimension_semantics=dims),
    )(x, w1_p, b1_p, wobj_p, bobj, wcls_p, bcls_p)

    objectness = obj.reshape(N, HW)
    class_logits = cls.reshape(N, k_pad)[:, :K]
    # TODO(synk): box regression / anchor decoding / NMS / ROIAlign /
    # detector_postprocess are dynamic, config-built detectron2 modules with no
    # clean Pallas equivalent; we return raw per-location objectness and
    # per-image class logits instead of Instances objects.
    return {"objectness": objectness, "class_logits": class_logits}


if __name__ == "__main__":
    key = jax.random.PRNGKey(0)
    N, C, H, W = 2, 4, 16, 16
    C_feat, num_classes = 32, 8

    k_img, k_w1, k_b1, k_wo, k_bo, k_wc, k_bc = jax.random.split(key, 7)
    images = jax.random.uniform(k_img, (N, C, H, W), jnp.float32) * 255.0

    params = {
        "pixel_mean": jnp.array([103.53, 116.28, 123.675, 110.0], jnp.float32),
        "pixel_std":  jnp.array([57.375, 57.12, 58.395, 55.0], jnp.float32),
        "w1":    jax.random.normal(k_w1, (C, C_feat), jnp.float32) * 0.1,
        "b1":    jax.random.normal(k_b1, (1, C_feat), jnp.float32) * 0.01,
        "w_obj": jax.random.normal(k_wo, (C_feat, 1), jnp.float32) * 0.1,
        "b_obj": jax.random.normal(k_bo, (1, 1), jnp.float32) * 0.01,
        "w_cls": jax.random.normal(k_wc, (C_feat, num_classes), jnp.float32) * 0.1,
        "b_cls": jax.random.normal(k_bc, (1, num_classes), jnp.float32) * 0.01,
    }

    out = jax.jit(dual_rcnn_forward)(images, params)
    jax.block_until_ready(out)

    # Pure-JAX reference for the same synthetic pipeline (f32 path => exact).
    HW = H * W
    x_norm = (images - params["pixel_mean"].reshape(1, C, 1, 1)) \
             / params["pixel_std"].reshape(1, C, 1, 1)
    x_cols = jnp.transpose(x_norm, (0, 2, 3, 1)).reshape(N * HW, C)
    feat_ref = jnp.maximum(x_cols @ params["w1"] + params["b1"], 0.0)
    obj_ref = (feat_ref @ params["w_obj"] + params["b_obj"]).reshape(N, HW)
    cls_ref = feat_ref.reshape(N, HW, C_feat).mean(axis=1) @ params["w_cls"] \
              + params["b_cls"]
    assert jnp.allclose(out["objectness"], obj_ref, atol=1e-4, rtol=1e-4)
    assert jnp.allclose(out["class_logits"], cls_ref, atol=1e-4, rtol=1e-4)

    print("KERNEL_OK")
</pallas_src>

<mosaic_0001>
module attributes {stable_mosaic.version = 11 : i64} {
  func.func @_rcnn_single_tile_kernel(%arg0: i32, %arg1: memref<1x4x256xf32, #tpu.memory_space<vmem>>, %arg2: memref<32x4xf32, #tpu.memory_space<vmem>>, %arg3: memref<32x1xf32, #tpu.memory_space<vmem>>, %arg4: memref<32x1xf32, #tpu.memory_space<vmem>>, %arg5: memref<1xf32, #tpu.memory_space<smem>>, %arg6: memref<32x128xf32, #tpu.memory_space<vmem>>, %arg7: memref<1x128xf32, #tpu.memory_space<vmem>>, %arg8: memref<1x1x256xf32, #tpu.memory_space<vmem>>, %arg9: memref<1x1x128xf32, #tpu.memory_space<vmem>>) attributes {dimension_semantics = [#tpu.dimension_semantics<parallel>], iteration_bounds = array<i64: 2>, scalar_prefetch = 0 : i64, scratch_operands = 0 : i64, tpu.core_type = #tpu.core_type<tc>, window_params = [{transform_indices = @transform_0, window_bounds = array<i64: 1, 4, 256>}, {pipeline_mode = #tpu.pipeline_mode<synchronous>, transform_indices = @transform_1, window_bounds = array<i64: 32, 4>}, {pipeline_mode = #tpu.pipeline_mode<synchronous>, transform_indices = @transform_2, window_bounds = array<i64: 32, 1>}, {pipeline_mode = #tpu.pipeline_mode<synchronous>, transform_indices = @transform_3, window_bounds = array<i64: 32, 1>}, {transform_indices = @transform_4, window_bounds = array<i64: 1>}, {pipeline_mode = #tpu.pipeline_mode<synchronous>, transform_indices = @transform_5, window_bounds = array<i64: 32, 128>}, {pipeline_mode = #tpu.pipeline_mode<synchronous>, transform_indices = @transform_6, window_bounds = array<i64: 1, 128>}, {transform_indices = @transform_7, window_bounds = array<i64: 1, 1, 256>}, {transform_indices = @transform_8, window_bounds = array<i64: 1, 1, 128>}]} {
    %c0 = arith.constant 0 : index
    %c0_0 = arith.constant 0 : index
    %c0_1 = arith.constant 0 : index
    %0 = vector.load %arg1[%c0, %c0_0, %c0_1] : memref<1x4x256xf32, #tpu.memory_space<vmem>>, vector<1x4x256xf32>
    %1 = vector.shape_cast %0 : vector<1x4x256xf32> to vector<4x256xf32>
    %c0_2 = arith.constant 0 : index
    %c0_3 = arith.constant 0 : index
    %2 = vector.load %arg2[%c0_2, %c0_3] : memref<32x4xf32, #tpu.memory_space<vmem>>, vector<32x4xf32>
    %cst = arith.constant dense<0.000000e+00> : vector<32x256xf32>
    %3 = tpu.matmul %2, %1, %cst {dimension_numbers = #tpu.dot_dimension_numbers<[1], [0], [0], [1], [0, 0, 1, 1], [], []>} : vector<32x4xf32>, vector<4x256xf32>, vector<32x256xf32> -> vector<32x256xf32>
    %c0_4 = arith.constant 0 : index
    %c0_5 = arith.constant 0 : index
    %4 = vector.load %arg3[%c0_4, %c0_5] : memref<32x1xf32, #tpu.memory_space<vmem>>, vector<32x1xf32>
    %5 = vector.broadcast %4 : vector<32x1xf32> to vector<32x256xf32>
    %6 = arith.addf %3, %5 : vector<32x256xf32>
    %cst_6 = arith.constant 0.000000e+00 : f32
    %7 = vector.broadcast %cst_6 : f32 to vector<32x256xf32>
    %8 = arith.maximumf %6, %7 : vector<32x256xf32>
    %c0_7 = arith.constant 0 : index
    %c0_8 = arith.constant 0 : index
    %9 = vector.load %arg4[%c0_7, %c0_8] : memref<32x1xf32, #tpu.memory_space<vmem>>, vector<32x1xf32>
    %10 = vector.broadcast %9 : vector<32x1xf32> to vector<32x256xf32>
    %11 = arith.mulf %8, %10 : vector<32x256xf32>
    %cst_9 = arith.constant dense<0.000000e+00> : vector<256xf32>
    %12 = vector.multi_reduction <add>, %11, %cst_9 [0] : vector<32x256xf32> to vector<256xf32>
    %13 = vector.shape_cast %12 : vector<256xf32> to vector<1x256xf32>
    %c0_10 = arith.constant 0 : index
    %14 = memref.load %arg5[%c0_10] : memref<1xf32, #tpu.memory_space<smem>>
    %15 = vector.broadcast %14 : f32 to vector<1x256xf32>
    %16 = arith.addf %13, %15 : vector<1x256xf32>
    %c0_11 = arith.constant 0 : index
    %c0_12 = arith.constant 0 : index
    %c0_13 = arith.constant 0 : index
    %17 = vector.load %arg8[%c0_11, %c0_12, %c0_13] : memref<1x1x256xf32, #tpu.memory_space<vmem>>, vector<1x1x256xf32>
    %18 = vector.shape_cast %17 : vector<1x1x256xf32> to vector<1x256xf32>
    %19 = vector.shape_cast %16 : vector<1x256xf32> to vector<1x1x256xf32>
    tpu.vector_store %arg8[%c0_11, %c0_12, %c0_13], %19 {strides = array<i32>} : memref<1x1x256xf32, #tpu.memory_space<vmem>>, vector<1x1x256xf32>,
    %cst_14 = arith.constant dense<0.000000e+00> : vector<32xf32>
    %20 = vector.multi_reduction <add>, %8, %cst_14 [1] : vector<32x256xf32> to vector<32xf32>
    %21 = vector.shape_cast %20 : vector<32xf32> to vector<32x1xf32>
    %cst_15 = arith.constant 3.906250e-03 : f32
    %22 = vector.broadcast %cst_15 : f32 to vector<32x1xf32>
    %23 = arith.mulf %21, %22 : vector<32x1xf32>
    %c0_16 = arith.constant 0 : index
    %c0_17 = arith.constant 0 : index
    %24 = vector.load %arg6[%c0_16, %c0_17] : memref<32x128xf32, #tpu.memory_space<vmem>>, vector<32x128xf32>
    %25 = vector.broadcast %23 : vector<32x1xf32> to vector<32x128xf32>
    %26 = arith.mulf %24, %25 : vector<32x128xf32>
    %cst_18 = arith.constant dense<0.000000e+00> : vector<128xf32>
    %27 = vector.multi_reduction <add>, %26, %cst_18 [0] : vector<32x128xf32> to vector<128xf32>
    %28 = vector.shape_cast %27 : vector<128xf32> to vector<1x128xf32>
    %c0_19 = arith.constant 0 : index
    %c0_20 = arith.constant 0 : index
    %29 = vector.load %arg7[%c0_19, %c0_20] : memref<1x128xf32, #tpu.memory_space<vmem>>, vector<1x128xf32>
    %30 = arith.addf %28, %29 : vector<1x128xf32>
    %c0_21 = arith.constant 0 : index
    %c0_22 = arith.constant 0 : index
    %c0_23 = arith.constant 0 : index
    %31 = vector.load %arg9[%c0_21, %c0_22, %c0_23] : memref<1x1x128xf32, #tpu.memory_space<vmem>>, vector<1x1x128xf32>
    %32 = vector.shape_cast %31 : vector<1x1x128xf32> to vector<1x128xf32>
    %33 = vector.shape_cast %30 : vector<1x128xf32> to vector<1x1x128xf32>
    tpu.vector_store %arg9[%c0_21, %c0_22, %c0_23], %33 {strides = array<i32>} : memref<1x1x128xf32, #tpu.memory_space<vmem>>, vector<1x1x128xf32>,
    return
  }
  func.func @transform_0(%arg0: i32) -> (i32, i32, i32) {
    %c0_i32 = arith.constant 0 : i32
    %c0_i32_0 = arith.constant 0 : i32
    %c0_i32_1 = arith.constant 0 : i32
    return %arg0, %c0_i32, %c0_i32_0 : i32, i32, i32
  }
  func.func @transform_1(%arg0: i32) -> (i32, i32) {
    %c0_i32 = arith.constant 0 : i32
    %c0_i32_0 = arith.constant 0 : i32
    %c0_i32_1 = arith.constant 0 : i32
    return %c0_i32, %c0_i32_0 : i32, i32
  }
  func.func @transform_2(%arg0: i32) -> (i32, i32) {
    %c0_i32 = arith.constant 0 : i32
    %c0_i32_0 = arith.constant 0 : i32
    %c0_i32_1 = arith.constant 0 : i32
    return %c0_i32, %c0_i32_0 : i32, i32
  }
  func.func @transform_3(%arg0: i32) -> (i32, i32) {
    %c0_i32 = arith.constant 0 : i32
    %c0_i32_0 = arith.constant 0 : i32
    %c0_i32_1 = arith.constant 0 : i32
    return %c0_i32, %c0_i32_0 : i32, i32
  }
  func.func @transform_4(%arg0: i32) -> i32 {
    %c0_i32 = arith.constant 0 : i32
    %c0_i32_0 = arith.constant 0 : i32
    return %c0_i32 : i32
  }
  func.func @transform_5(%arg0: i32) -> (i32, i32) {
    %c0_i32 = arith.constant 0 : i32
    %c0_i32_0 = arith.constant 0 : i32
    %c0_i32_1 = arith.constant 0 : i32
    return %c0_i32, %c0_i32_0 : i32, i32
  }
  func.func @transform_6(%arg0: i32) -> (i32, i32) {
    %c0_i32 = arith.constant 0 : i32
    %c0_i32_0 = arith.constant 0 : i32
    %c0_i32_1 = arith.constant 0 : i32
    return %c0_i32, %c0_i32_0 : i32, i32
  }
  func.func @transform_7(%arg0: i32) -> (i32, i32, i32) {
    %c0_i32 = arith.constant 0 : i32
    %c0_i32_0 = arith.constant 0 : i32
    %c0_i32_1 = arith.constant 0 : i32
    return %arg0, %c0_i32, %c0_i32_0 : i32, i32, i32
  }
  func.func @transform_8(%arg0: i32) -> (i32, i32, i32) {
    %c0_i32 = arith.constant 0 : i32
    %c0_i32_0 = arith.constant 0 : i32
    %c0_i32_1 = arith.constant 0 : i32
    return %arg0, %c0_i32, %c0_i32_0 : i32, i32, i32
  }
}

</mosaic_0001>

<llo_original>
// kernel: dual_rcnn_forward.1
$region0: #{dual_rcnn_forward.1}
  #allocation0 [shape = 'u32[]', space=smem, size = 0x4, offset = 0x4, fixed_abs, tag = 'smem constant byte address 0x4 - core index']
  #allocation1 [shape = 'u32[144,128]{1,0:T(1,128)}', space=vmem, size = 0x12000, scoped, tag = 'internal scratch']
  #allocation2 [shape = 'f32[1]{0:T(128)S(6)}', space=smem, size = 0x200, scoped, tag = 'scoped memory for dual_rcnn_forward.1']
  %s0 = inlined_call_operand.vmem [shape: f32[2,4,256], index: 0, kind: input, shape index: {}]
  %s1 = inlined_call_operand.vmem [shape: f32[32,4], index: 1, kind: input, shape index: {}]
  %s2 = inlined_call_operand.vmem [shape: f32[32,1], index: 2, kind: input, shape index: {}]
  %s3 = inlined_call_operand.vmem [shape: f32[32,1], index: 3, kind: input, shape index: {}]
  %s4 = inlined_call_operand.<no memory space> [shape: f32[1], index: 4, kind: input, shape index: {}]
  %s5 = inlined_call_operand.vmem [shape: f32[32,128], index: 5, kind: input, shape index: {}]
  %s6 = inlined_call_operand.vmem [shape: f32[1,128], index: 6, kind: input, shape index: {}]
  %s7 = inlined_call_operand.vmem [shape: f32[2,1,256], index: 7, kind: output, shape index: {0}]
  %s8 = inlined_call_operand.hbm [shape: f32[2,1,128], index: 8, kind: output, shape index: {1}]
  %9 = xla_tuple %s7, %s8
  %s10 = sld [smem:[#allocation0]]
  $region69: #{dual_rcnn_forward.1} parent=0
    _
  %s12 = ssub.s32 1, %s10
  %s13 = scalar_select 0, %s12, %s10
  %14 = sst [smem:[#allocation2]] %s4
  $region1: #{dual_rcnn_forward.1} parent=0
    #allocation3 [shape = 'u8[1024]{0}', space=vmem, size = 0x400, scoped, tag = 'output window, operand 1']
    #allocation4 [shape = 's32[2]{0}', space=sflag, size = 0x8, scoped, tag = 'scoped memory for dual_rcnn_forward.1']
    %15 = vsyncpa [#allocation4], 0
    %s16 = scalar_lea.sflag [#allocation4], 1
    %17 = vsyncpa %s16, 0
    loop: start=0, step=1, limit=4
    $region2: #{dual_rcnn_forward.1} parent=1 // loop_pre_header
      _
    $region3: #{dual_rcnn_forward.1} parent=1 // loop_header
      %s19 = sphi 0, %s23
      %p20 = scmp.ge.s32.totalorder %s19, 4
      %s29 = sphi 0, %s31
      %s32 = sphi 0, %s29
      %s33 = sphi 0, %s32
      %s49 = sphi 0, %s33
      %s53 = sphi 0, %s53
      %s55 = sphi 0, %s53
      %s56 = sphi 0, %s55
      %s70 = sphi 0, %s56
      %s74 = sphi 0, %s74
      %s76 = sphi 0, %s74
      %s77 = sphi 0, %s76
      %s91 = sphi 0, %s77
      %s95 = sphi 0, %s95
      %s97 = sphi 0, %s95
      %s98 = sphi 0, %s97
      %s112 = sphi 0, %s98
      %s116 = sphi 0, %s116
      %s118 = sphi 0, %s116
      %s119 = sphi 0, %s118
      %s133 = sphi 0, %s119
      %s137 = sphi 0, %s137
      %s139 = sphi 0, %s137
      %s140 = sphi 0, %s139
      %s154 = sphi 0, %s140
      %s158 = sphi 0, %s158
      %s160 = sphi 0, %s158
      %s161 = sphi 0, %s160
      %s175 = sphi 0, %s161
      %s181 = sphi 0, %s183
      %s184 = sphi 0, %s181
      %s185 = sphi 0, %s184
      %s201 = sphi 0, %s185
      %s207 = sphi 0, %s209
      %s210 = sphi 0, %s207
      %s211 = sphi 0, %s210
      %s227 = sphi 0, %s211
    $region4: #{dual_rcnn_forward.1} parent=1 // loop_header_branch
      %22 = sbr.rel (%p20) target = $region8
    $region5: #{dual_rcnn_forward.1} parent=1 // loop_body
      %s24 = ssub.s32 %s19, 1
      %s25 = ssub.s32 %s19, 2
      %s26 = sadd.s32 %s19, 1
      %s27 = ssub.s32 %s19, %s26
      %p28 = scmp.eq.s32.totalorder %s27, 0
      %s30 = sadd.s32 %s29, 1
      %s31 = scalar_select %p28, %s29, %s30
      %p34 = pneg %p28
      %p35 = scmp.eq.s32.totalorder %s19, 1
      %p36 = por %p34, %p35
      %p37 = scmp.ne.s32.totalorder %s29, %s32
      %p38 = scmp.eq.s32.totalorder %s19, 0
      %p39 = por %p37, %p38
      %p40 = scmp.ne.s32.totalorder %s29, %s32
      %p41 = scmp.eq.s32.totalorder %s24, 1
      %p42 = por %p40, %p41
      %p43 = scmp.ne.s32.totalorder %s32, %s33
      %p44 = scmp.eq.s32.totalorder %s24, 0
      %p45 = por %p43, %p44
      %p46 = scmp.ne.s32.totalorder %s32, %s33
      %p47 = scmp.eq.s32.totalorder %s25, 1
      %p48 = por %p46, %p47
      %p50 = scmp.ne.s32.totalorder %s33, %s49
      %p51 = scmp.eq.s32.totalorder %s25, 0
      %p52 = por %p50, %p51
      %s54 = sadd.s32 %s53, 1
      %p57 = scmp.eq.s32.totalorder %s19, 1
      %p58 = scmp.ne.s32.totalorder %s53, %s55
      %p59 = scmp.eq.s32.totalorder %s19, 0
      %p60 = por %p58, %p59
      %p61 = scmp.ne.s32.totalorder %s53, %s55
      %p62 = scmp.eq.s32.totalorder %s24, 1
      %p63 = por %p61, %p62
      %p64 = scmp.ne.s32.totalorder %s55, %s56
      %p65 = scmp.eq.s32.totalorder %s24, 0
      %p66 = por %p64, %p65
      %p67 = scmp.ne.s32.totalorder %s55, %s56
      %p68 = scmp.eq.s32.totalorder %s25, 1
      %p69 = por %p67, %p68
      %p71 = scmp.ne.s32.totalorder %s56, %s70
      %p72 = scmp.eq.s32.totalorder %s25, 0
      %p73 = por %p71, %p72
      %s75 = sadd.s32 %s74, 1
      %p78 = scmp.eq.s32.totalorder %s19, 1
      %p79 = scmp.ne.s32.totalorder %s74, %s76
      %p80 = scmp.eq.s32.totalorder %s19, 0
      %p81 = por %p79, %p80
      %p82 = scmp.ne.s32.totalorder %s74, %s76
      %p83 = scmp.eq.s32.totalorder %s24, 1
      %p84 = por %p82, %p83
      %p85 = scmp.ne.s32.totalorder %s76, %s77
      %p86 = scmp.eq.s32.totalorder %s24, 0
      %p87 = por %p85, %p86
      %p88 = scmp.ne.s32.totalorder %s76, %s77
      %p89 = scmp.eq.s32.totalorder %s25, 1
      %p90 = por %p88, %p89
      %p92 = scmp.ne.s32.totalorder %s77, %s91
      %p93 = scmp.eq.s32.totalorder %s25, 0
      %p94 = por %p92, %p93
      %s96 = sadd.s32 %s95, 1
      %p99 = scmp.eq.s32.totalorder %s19, 1
      %p100 = scmp.ne.s32.totalorder %s95, %s97
      %p101 = scmp.eq.s32.totalorder %s19, 0
      %p102 = por %p100, %p101
      %p103 = scmp.ne.s32.totalorder %s95, %s97
      %p104 = scmp.eq.s32.totalorder %s24, 1
      %p105 = por %p103, %p104
      %p106 = scmp.ne.s32.totalorder %s97, %s98
      %p107 = scmp.eq.s32.totalorder %s24, 0
      %p108 = por %p106, %p107
      %p109 = scmp.ne.s32.totalorder %s97, %s98
      %p110 = scmp.eq.s32.totalorder %s25, 1
      %p111 = por %p109, %p110
      %p113 = scmp.ne.s32.totalorder %s98, %s112
      %p114 = scmp.eq.s32.totalorder %s25, 0
      %p115 = por %p113, %p114
      %s117 = sadd.s32 %s116, 1
      %p120 = scmp.eq.s32.totalorder %s19, 1
      %p121 = scmp.ne.s32.totalorder %s116, %s118
      %p122 = scmp.eq.s32.totalorder %s19, 0
      %p123 = por %p121, %p122
      %p124 = scmp.ne.s32.totalorder %s116, %s118
      %p125 = scmp.eq.s32.totalorder %s24, 1
      %p126 = por %p124, %p125
      %p127 = scmp.ne.s32.totalorder %s118, %s119
      %p128 = scmp.eq.s32.totalorder %s24, 0
      %p129 = por %p127, %p128
      %p130 = scmp.ne.s32.totalorder %s118, %s119
      %p131 = scmp.eq.s32.totalorder %s25, 1
      %p132 = por %p130, %p131
      %p134 = scmp.ne.s32.totalorder %s119, %s133
      %p135 = scmp.eq.s32.totalorder %s25, 0
      %p136 = por %p134, %p135
      %s138 = sadd.s32 %s137, 1
      %p141 = scmp.eq.s32.totalorder %s19, 1
      %p142 = scmp.ne.s32.totalorder %s137, %s139
      %p143 = scmp.eq.s32.totalorder %s19, 0
      %p144 = por %p142, %p143
      %p145 = scmp.ne.s32.totalorder %s137, %s139
      %p146 = scmp.eq.s32.totalorder %s24, 1
      %p147 = por %p145, %p146
      %p148 = scmp.ne.s32.totalorder %s139, %s140
      %p149 = scmp.eq.s32.totalorder %s24, 0
      %p150 = por %p148, %p149
      %p151 = scmp.ne.s32.totalorder %s139, %s140
      %p152 = scmp.eq.s32.totalorder %s25, 1
      %p153 = por %p151, %p152
      %p155 = scmp.ne.s32.totalorder %s140, %s154
      %p156 = scmp.eq.s32.totalorder %s25, 0
      %p157 = por %p155, %p156
      %s159 = sadd.s32 %s158, 1
      %p162 = scmp.eq.s32.totalorder %s19, 1
      %p163 = scmp.ne.s32.totalorder %s158, %s160
      %p164 = scmp.eq.s32.totalorder %s19, 0
      %p165 = por %p163, %p164
      %p166 = scmp.ne.s32.totalorder %s158, %s160
      %p167 = scmp.eq.s32.totalorder %s24, 1
      %p168 = por %p166, %p167
      %p169 = scmp.ne.s32.totalorder %s160, %s161
      %p170 = scmp.eq.s32.totalorder %s24, 0
      %p171 = por %p169, %p170
      %p172 = scmp.ne.s32.totalorder %s160, %s161
      %p173 = scmp.eq.s32.totalorder %s25, 1
      %p174 = por %p172, %p173
      %p176 = scmp.ne.s32.totalorder %s161, %s175
      %p177 = scmp.eq.s32.totalorder %s25, 0
      %p178 = por %p176, %p177
      %s179 = ssub.s32 %s19, %s26
      %p180 = scmp.eq.s32.totalorder %s179, 0
      %s182 = sadd.s32 %s181, 1
      %s183 = scalar_select %p180, %s181, %s182
      %p186 = pneg %p180
      %p187 = scmp.eq.s32.totalorder %s19, 1
      %p188 = por %p186, %p187
      %p189 = scmp.ne.s32.totalorder %s181, %s184
      %p190 = scmp.eq.s32.totalorder %s19, 0
      %p191 = por %p189, %p190
      %p192 = scmp.ne.s32.totalorder %s181, %s184
      %p193 = scmp.eq.s32.totalorder %s24, 1
      %p194 = por %p192, %p193
      %p195 = scmp.ne.s32.totalorder %s184, %s185
      %p196 = scmp.eq.s32.totalorder %s24, 0
      %p197 = por %p195, %p196
      %p198 = scmp.ne.s32.totalorder %s184, %s185
      %p199 = scmp.eq.s32.totalorder %s25, 1
      %p200 = por %p198, %p199
      %p202 = scmp.ne.s32.totalorder %s185, %s201
      %p203 = scmp.eq.s32.totalorder %s25, 0
      %p204 = por %p202, %p203
      %s205 = ssub.s32 %s19, %s26
      %p206 = scmp.eq.s32.totalorder %s205, 0
      %s208 = sadd.s32 %s207, 1
      %s209 = scalar_select %p206, %s207, %s208
      %p212 = pneg %p206
      %p213 = scmp.eq.s32.totalorder %s19, 1
      %p214 = por %p212, %p213
      %p215 = scmp.ne.s32.totalorder %s207, %s210
      %p216 = scmp.eq.s32.totalorder %s19, 0
      %p217 = por %p215, %p216
      %p218 = scmp.ne.s32.totalorder %s207, %s210
      %p219 = scmp.eq.s32.totalorder %s24, 1
      %p220 = por %p218, %p219
      %p221 = scmp.ne.s32.totalorder %s210, %s211
      %p222 = scmp.eq.s32.totalorder %s24, 0
      %p223 = por %p221, %p222
      %p224 = scmp.ne.s32.totalorder %s210, %s211
      %p225 = scmp.eq.s32.totalorder %s25, 1
      %p226 = por %p224, %p225
      %p228 = scmp.ne.s32.totalorder %s211, %s227
      %p229 = scmp.eq.s32.totalorder %s25, 0
      %p230 = por %p228, %p229
      %p231 = scmp.le.s32.totalorder 1, %s19
      %p232 = scmp.lt.s32.totalorder %s19, 3
      %p233 = pnand %p231, %p232
      %p234 = pneg %p233
      // Predicated region
      $region9: #{dual_rcnn_forward.1} parent=5 // pred_check
        _
      $region10: #{dual_rcnn_forward.1} parent=5 // pred_check_branch
        %236 = sbr.rel (%p233) target = $region12
      $region11: #{dual_rcnn_forward.1} parent=5 // pred_region
        %s237 = ssub.s32 %s19, 1
        // Predicated region
        $region13: #{dual_rcnn_forward.1} parent=11 // pred_check
          %p238 = pneg %p66
        $region14: #{dual_rcnn_forward.1} parent=11 // pred_check_branch
          %240 = sbr.rel (%p238) target = $region16
        $region15: #{dual_rcnn_forward.1} parent=11 // pred_region
          _
        $region16: #{dual_rcnn_forward.1} parent=11 // pred_fallthru
          _
        // Predicated region
        $region17: #{dual_rcnn_forward.1} parent=11 // pred_check
          %p241 = pneg %p87
        $region18: #{dual_rcnn_forward.1} parent=11 // pred_check_branch
          %243 = sbr.rel (%p241) target = $region20
        $region19: #{dual_rcnn_forward.1} parent=11 // pred_region
          _
        $region20: #{dual_rcnn_forward.1} parent=11 // pred_fallthru
          _
        // Predicated region
        $region21: #{dual_rcnn_forward.1} parent=11 // pred_check
          %p244 = pneg %p108
        $region22: #{dual_rcnn_forward.1} parent=11 // pred_check_branch
          %246 = sbr.rel (%p244) target = $region24
        $region23: #{dual_rcnn_forward.1} parent=11 // pred_region
          _
        $region24: #{dual_rcnn_forward.1} parent=11 // pred_fallthru
          _
        // Predicated region
        $region25: #{dual_rcnn_forward.1} parent=11 // pred_check
          %p247 = pneg %p129
        $region26: #{dual_rcnn_forward.1} parent=11 // pred_check_branch
          %249 = sbr.rel (%p247) target = $region28
        $region27: #{dual_rcnn_forward.1} parent=11 // pred_region
          _
        $region28: #{dual_rcnn_forward.1} parent=11 // pred_fallthru
          _
        // Predicated region
        $region29: #{dual_rcnn_forward.1} parent=11 // pred_check
          %p250 = pneg %p150
        $region30: #{dual_rcnn_forward.1} parent=11 // pred_check_branch
          %252 = sbr.rel (%p250) target = $region32
        $region31: #{dual_rcnn_forward.1} parent=11 // pred_region
          _
        $region32: #{dual_rcnn_forward.1} parent=11 // pred_fallthru
          _
        // Predicated region
        $region33: #{dual_rcnn_forward.1} parent=11 // pred_check
          %p253 = pneg %p171
        $region34: #{dual_rcnn_forward.1} parent=11 // pred_check_branch
          %255 = sbr.rel (%p253) target = $region36
        $region35: #{dual_rcnn_forward.1} parent=11 // pred_region
          _
        $region36: #{dual_rcnn_forward.1} parent=11 // pred_fallthru
          _
      $region12: #{dual_rcnn_forward.1} parent=5 // pred_fallthru
        _
      %p256 = scmp.lt.s32.totalorder %s19, 2
      // Predicated region
      $region37: #{dual_rcnn_forward.1} parent=5 // pred_check
        %p257 = pneg %p256
      $region38: #{dual_rcnn_forward.1} parent=5 // pred_check_branch
        %259 = sbr.rel (%p257) target = $region40
      $region39: #{dual_rcnn_forward.1} parent=5 // pred_region
        // Predicated region
        $region41: #{dual_rcnn_forward.1} parent=39 // pred_check
          %p260 = pneg %p39
        $region42: #{dual_rcnn_forward.1} parent=39 // pred_check_branch
          %262 = sbr.rel (%p260) target = $region44
        $region43: #{dual_rcnn_forward.1} parent=39 // pred_region
          %p263 = scmp.lt.s32.totalorder %s19, 1
          %s264 = scalar_select %p263, %s19, 1
          %s265 = smul.addr %s264, 2
          %s266 = smul.addr %s265, 4
          %s267 = scalar_lea.vmem %s0, %s266
        $region44: #{dual_rcnn_forward.1} parent=39 // pred_fallthru
          _
      $region40: #{dual_rcnn_forward.1} parent=5 // pred_fallthru
        _
      %p268 = scmp.le.s32.totalorder 1, %s19
      %p269 = scmp.lt.s32.totalorder %s19, 3
      %p270 = pnand %p268, %p269
      %p271 = pneg %p270
      // Predicated region
      $region45: #{dual_rcnn_forward.1} parent=5 // pred_check
        _
      $region46: #{dual_rcnn_forward.1} parent=5 // pred_check_branch
        %273 = sbr.rel (%p270) target = $region48
      $region47: #{dual_rcnn_forward.1} parent=5 // pred_region
        %s274 = ssub.s32 %s19, 1
        %p275 = scmp.lt.s32.totalorder %s24, 1
        %s276 = scalar_select %p275, %s24, 1
        %s277 = smul.addr %s276, 2
        %s278 = smul.addr %s277, 4
        %s279 = scalar_lea.vmem %s0, %s278
        %p280 = pneg %p45
        %p281 = pneg %p42
        %p282 = pneg %p66
        %p283 = pneg %p63
        %p284 = pneg %p87
        %p285 = pneg %p84
        %p286 = pneg %p108
        %p287 = pneg %p105
        %p288 = pneg %p129
        %p289 = pneg %p126
        %p290 = pneg %p150
        %p291 = pneg %p147
        %p292 = pneg %p171
        %p293 = pneg %p168
        %p294 = pneg %p197
        %p295 = pneg %p194
        %p296 = scmp.lt.s32.totalorder %s24, 1
        %s297 = scalar_select %p296, %s24, 1
        %s298 = smul.addr %s297, 2
        %s299 = scalar_lea.vmem %s7, %s298
        %p300 = pneg %p223
        %p301 = pneg %p220
        %s302 = sand.u32 %s210, 1
        %s303 = scalar_lea.sflag [#allocation4], %s302
        %s304 = sand.u32 %s210, 1
        %s305 = scalar_lea.vmem [#allocation3], %s304
        %p306 = scmp.lt.s32.totalorder %s24, 1
        %s307 = scalar_select %p306, %s24, 1
        %s308 = smul.addr %s307, 2
        %s309 = smul.addr %s308, 4
        %s310 = scalar_lea.vmem %s0, %s309
        %p311 = scmp.lt.s32.totalorder %s24, 1
        %s312 = scalar_select %p311, %s24, 1
        %s313 = smul.addr %s312, 2
        %s314 = scalar_lea.vmem %s7, %s313
        %v315 = vld [vmem:[%s310] sm:$0xff]
        %v316 = vld [vmem:[%s1] sm:$0xff]
        %v317 = vld [vmem:[%s1 + $0x8] sm:$0xff]
        %v318 = vld [vmem:[%s1 + $0x10] sm:$0xff]
        %v319 = vld [vmem:[%s1 + $0x18] sm:$0xff]
        %v320 = vld [vmem:[%s2] sm:$0xff]
        %v321 = vld [vmem:[%s2 + $0x8] sm:$0xff]
        %v322 = vld [vmem:[%s2 + $0x10] sm:$0xff]
        %v323 = vld [vmem:[%s2 + $0x18] sm:$0xff]
        %325 = vset.pattern.permute.xlu0 0
        %326 = vperm.xlu0 %325, %v320
        %v327 = vpop.permute.xlu0 %326
        %330 = vset.pattern.permute.xlu0 0
        %331 = vperm.xlu0 %330, %v321
        %v332 = vpop.permute.xlu0 %331
        %335 = vset.pattern.permute.xlu0 0
        %336 = vperm.xlu0 %335, %v322
        %v337 = vpop.permute.xlu0 %336
        %340 = vset.pattern.permute.xlu0 0
        %341 = vperm.xlu0 %340, %v323
        %v342 = vpop.permute.xlu0 %341
        %v345 = vcombine.high %v315, %v315
        %vm346 = vcmask 31744
        %v348 = vsel %vm346, %v316, 0
        %v351 = vsel %vm346, %v317, 0
        %v354 = vsel %vm346, %v318, 0
        %v357 = vsel %vm346, %v319, 0
        %vm359 = vcmask 1043456
        %v360 = vsel %vm359, %v315, 0
        %v362 = vsel %vm359, %v345, 0
        %364 = vmatprep.subr.mxu0 %v362
        %365 = vmatpush1.msra.mxu0 %v360
        %366 = vmatprep.subr.mxu0 0.0
        %367 = vmatpush1.msra.mxu0 0.0
        %368 = vmatprep.subr.mxu0 0.0
        %369 = vmatpush1.msra.mxu0 0.0
        %370 = vmatprep.subr.mxu0 0.0
        %371 = vmatpush1.msra.mxu0 0.0
        %372 = vmatprep.subr.mxu0 0.0
        %373 = vmatpush1.msra.mxu0 0.0
        %374 = vmatprep.subr.mxu0 0.0
        %375 = vmatpush1.msra.mxu0 0.0
        %376 = vmatprep.subr.mxu0 0.0
        %377 = vmatpush1.msra.mxu0 0.0
        %378 = vmatprep.subr.mxu0 0.0
        %379 = vmatpush1.msra.mxu0 0.0
        %380 = vmatprep.subr.mxu0 0.0
        %381 = vmatpush1.msra.mxu0 0.0
        %382 = vmatprep.subr.mxu0 0.0
        %383 = vmatpush1.msra.mxu0 0.0
        %384 = vmatprep.subr.mxu0 0.0
        %385 = vmatpush1.msra.mxu0 0.0
        %386 = vmatprep.subr.mxu0 0.0
        %387 = vmatpush1.msra.mxu0 0.0
        %388 = vmatprep.subr.mxu0 0.0
        %389 = vmatpush1.msra.mxu0 0.0
        %390 = vmatprep.subr.mxu0 0.0
        %391 = vmatpush1.msra.mxu0 0.0
        %392 = vmatprep.subr.mxu0 0.0
        %393 = vmatpush1.msra.mxu0 0.0
        %394 = vmatprep.subr.mxu0 0.0
        %395 = vmatpush1.msra.mxu0 0.0
        %396 = vmatprep.subr.mxu0 0.0
        %397 = vmatpush1.msra.mxu0 0.0
        %398 = vmatprep.subr.mxu0 0.0
        %399 = vmatpush1.msra.mxu0 0.0
        %400 = vmatprep.subr.mxu0 0.0
        %401 = vmatpush1.msra.mxu0 0.0
        %402 = vmatprep.subr.mxu0 0.0
        %403 = vmatpush1.msra.mxu0 0.0
        %404 = vmatprep.subr.mxu0 0.0
        %405 = vmatpush1.msra.mxu0 0.0
        %406 = vmatprep.subr.mxu0 0.0
        %407 = vmatpush1.msra.mxu0 0.0
        %408 = vmatprep.subr.mxu0 0.0
        %409 = vmatpush1.msra.mxu0 0.0
        %410 = vmatprep.subr.mxu0 0.0
        %411 = vmatpush1.msra.mxu0 0.0
        %412 = vmatprep.subr.mxu0 0.0
        %413 = vmatpush1.msra.mxu0 0.0
        %414 = vmatprep.subr.mxu0 0.0
        %415 = vmatpush1.msra.mxu0 0.0
        %416 = vmatprep.subr.mxu0 0.0
        %417 = vmatpush1.msra.mxu0 0.0
        %418 = vmatprep.subr.mxu0 0.0
        %419 = vmatpush1.msra.mxu0 0.0
        %420 = vmatprep.subr.mxu0 0.0
        %421 = vmatpush1.msra.mxu0 0.0
        %422 = vmatprep.subr.mxu0 0.0
        %423 = vmatpush1.msra.mxu0 0.0
        %424 = vmatprep.subr.mxu0 0.0
        %425 = vmatpush1.msra.mxu0 0.0
        %426 = vmatprep.subr.mxu0 0.0
        %427 = vmatpush1.msra.mxu0 0.0
        %428 = vmatprep.mubr.f32.mxu0 0.0
        %429 = vmatmul.mubr.f32.gmra.mrb[0].mxu0 %v348
        %v430 = vpop.f32.mrb[0].mxu0
        %v431 = vadd.f32 %v327, %v430
        %v432 = vpop.f32.mrb[0].mxu0
        %v433 = vadd.f32 %v327, %v432
        %434 = vmatprep.mubr.f32.mxu0 0.0
        %435 = vmatmul.mubr.f32.gmra.mrb[0].mxu0 %v351
        %v436 = vpop.f32.mrb[0].mxu0
        %v437 = vadd.f32 %v332, %v436
        %v438 = vpop.f32.mrb[0].mxu0
        %v439 = vadd.f32 %v332, %v438
        %440 = vmatprep.mubr.f32.mxu0 0.0
        %441 = vmatmul.mubr.f32.gmra.mrb[0].mxu0 %v354
        %v442 = vpop.f32.mrb[0].mxu0
        %v443 = vadd.f32 %v337, %v442
        %v444 = vpop.f32.mrb[0].mxu0
        %v445 = vadd.f32 %v337, %v444
        %446 = vmatprep.mubr.f32.mxu0 0.0
        %447 = vmatmul.mubr.f32.gmra.mrb[0].mxu0 %v357
        %v448 = vpop.f32.mrb[0].mxu0
        %v449 = vadd.f32 %v342, %v448
        %v450 = vpop.f32.mrb[0].mxu0
        %v451 = vadd.f32 %v342, %v450
        %452 = vdwg.mxu0
        %v453 = vmax.f32 %v431, 0.0
        %v454 = vmax.f32 %v433, 0.0
        %v455 = vmax.f32 %v437, 0.0
        %v456 = vmax.f32 %v439, 0.0
        %v457 = vmax.f32 %v443, 0.0
        %v458 = vmax.f32 %v445, 0.0
        %v459 = vmax.f32 %v449, 0.0
        %v460 = vmax.f32 %v451, 0.0
        %v461 = vld [vmem:[%s3] sm:$0xff]
        %v462 = vld [vmem:[%s3 + $0x8] sm:$0xff]
        %v463 = vld [vmem:[%s3 + $0x10] sm:$0xff]
        %v464 = vld [vmem:[%s3 + $0x18] sm:$0xff]
        %466 = vset.pattern.permute.xlu0 0
        %467 = vperm.xlu0 %466, %v461
        %v468 = vpop.permute.xlu0 %467
        %471 = vset.pattern.permute.xlu0 0
        %472 = vperm.xlu0 %471, %v462
        %v473 = vpop.permute.xlu0 %472
        %476 = vset.pattern.permute.xlu0 0
        %477 = vperm.xlu0 %476, %v463
        %v478 = vpop.permute.xlu0 %477
        %481 = vset.pattern.permute.xlu0 0
        %482 = vperm.xlu0 %481, %v464
        %v483 = vpop.permute.xlu0 %482
        %v485 = vmul.f32 %v453, %v468
        %v486 = vmul.f32 %v454, %v468
        %v487 = vmul.f32 %v455, %v473
        %v488 = vmul.f32 %v456, %v473
        %v489 = vmul.f32 %v457, %v478
        %v490 = vmul.f32 %v458, %v478
        %v491 = vmul.f32 %v459, %v483
        %v492 = vmul.f32 %v460, %v483
        %v493 = vadd.f32 %v485, %v487
        %v494 = vadd.f32 %v493, %v489
        %v495 = vadd.f32 %v494, %v491
        %v496 = vrot.slane %v495, 4
        %v497 = vadd.f32 %v495, %v496
        %v498 = vrot.slane %v497, 2
        %v499 = vadd.f32 %v497, %v498
        %v500 = vrot.slane %v499, 1
        %v501 = vadd.f32 %v499, %v500
        %v502 = vadd.f32 %v486, %v488
        %v503 = vadd.f32 %v502, %v490
        %v504 = vadd.f32 %v503, %v492
        %v505 = vrot.slane %v504, 4
        %v506 = vadd.f32 %v504, %v505
        %v507 = vrot.slane %v506, 2
        %v508 = vadd.f32 %v506, %v507
        %v509 = vrot.slane %v508, 1
        %v510 = vadd.f32 %v508, %v509
        %s511 = sld [smem:[#allocation2]]
        %v512 = vstv %s511
        %v513 = vadd.f32 %v501, %v512
        %v514 = vadd.f32 %v510, %v512
        %v517 = vcombine.low %v513, %v514
        %v519 = vunpack.c.l.s4 1966171168
        %v520 = vunpack.c.0.s8 %v519
        %v521 = vlaneseq
        %v522 = vshrl.u32 %v521, 7
        %v523 = vsub.s32 %v520, %v522
        %v524 = vrot.slane %v517, %v523
        %v526 = vunpack.c.l.s4 1966171168
        %v527 = vunpack.c.0.s8 %v526
        %v528 = vlaneseq
        %v529 = vshrl.u32 %v528, 7
        %v530 = vsub.s32 %v527, %v529
        %v531 = vrot.slane %v524, %v530
        %v533 = vlaneseq
        %vm534 = vcmp.ge.s32.totalorder %v533, 0
        %vm535 = vcmp.lt.s32.totalorder %v533, 256
        %vm536 = vmand %vm534, %vm535
        %537 = vst.msk [vmem:[%s314] sm:$0x3] %vm536, %v531
        %v538 = vadd.f32 %v453, %v454
        %539 = vadd.xlane.f32.xlu0 %v538
        %v540 = vpop.xlane.xlu0 %539
        %v541 = vadd.f32 %v455, %v456
        %542 = vadd.xlane.f32.xlu0 %v541
        %v543 = vpop.xlane.xlu0 %542
        %v544 = vadd.f32 %v457, %v458
        %545 = vadd.xlane.f32.xlu0 %v544
        %v546 = vpop.xlane.xlu0 %545
        %v547 = vadd.f32 %v459, %v460
        %548 = vadd.xlane.f32.xlu0 %v547
        %v549 = vpop.xlane.xlu0 %548
        %v550 = vmul.f32 %v540, 0.00390625
        %v551 = vmul.f32 %v543, 0.00390625
        %v552 = vmul.f32 %v546, 0.00390625
        %v553 = vmul.f32 %v549, 0.00390625
        %v554 = vld [vmem:[%s5] sm:$0xff]
        %v555 = vld [vmem:[%s5 + $0x8] sm:$0xff]
        %v556 = vld [vmem:[%s5 + $0x10] sm:$0xff]
        %v557 = vld [vmem:[%s5 + $0x18] sm:$0xff]
        %v558 = vmul.f32 %v554, %v550
        %v559 = vmul.f32 %v555, %v551
        %v560 = vmul.f32 %v556, %v552
        %v561 = vmul.f32 %v557, %v553
        %v562 = vadd.f32 %v558, %v559
        %v563 = vadd.f32 %v562, %v560
        %v564 = vadd.f32 %v563, %v561
        %v565 = vrot.slane %v564, 4
        %v566 = vadd.f32 %v564, %v565
        %v567 = vrot.slane %v566, 2
        %v568 = vadd.f32 %v566, %v567
        %v569 = vrot.slane %v568, 1
        %v570 = vadd.f32 %v568, %v569
        %v571 = vld [vmem:[%s6] sm:$0x1]
        %v572 = vadd.f32 %v570, %v571
        %573 = vst [vmem:[%s305] sm:$0x1] %v572
        %p574 = scmp.lt.s32.totalorder %s24, 1
        %s575 = scalar_select %p574, %s24, 1
        %s576 = smul.addr %s575, 2
        %s577 = scalar_lea.vmem %s7, %s576
        %s578 = sand.u32 %s210, 1
        %s579 = scalar_lea.sflag [#allocation4], %s578
        %s580 = sand.u32 %s210, 1
        %s581 = scalar_lea.vmem [#allocation3], %s580
        // Predicated region
        $region49: #{dual_rcnn_forward.1} parent=47 // pred_check
          %p582 = pneg %p194
        $region50: #{dual_rcnn_forward.1} parent=47 // pred_check_branch
          %584 = sbr.rel (%p582) target = $region52
        $region51: #{dual_rcnn_forward.1} parent=47 // pred_region
          _
        $region52: #{dual_rcnn_forward.1} parent=47 // pred_fallthru
          _
        // Predicated region
        $region53: #{dual_rcnn_forward.1} parent=47 // pred_check
          %p585 = pneg %p220
        $region54: #{dual_rcnn_forward.1} parent=47 // pred_check_branch
          %587 = sbr.rel (%p585) target = $region56
        $region55: #{dual_rcnn_forward.1} parent=47 // pred_region
          %s589 = ssub.s32 16, 16
          %590 = vsyncadd %s579, %s589
          %s591 = smul.addr %s24, 16
          %s592 = scalar_lea.hbm %s8, %s591
          %s594 = sshll.u32 %s581, 4
          %s595 = int_to_ptr.vmem [resolvable:$true] %s594
          %597 = dma.vmem_to_hbm [thread:$0]  %s595, 16, %s592, %s579
        $region56: #{dual_rcnn_forward.1} parent=47 // pred_fallthru
          _
      $region48: #{dual_rcnn_forward.1} parent=5 // pred_fallthru
        _
      %p598 = scmp.le.s32.totalorder 2, %s19
      // Predicated region
      $region57: #{dual_rcnn_forward.1} parent=5 // pred_check
        %p599 = pneg %p598
      $region58: #{dual_rcnn_forward.1} parent=5 // pred_check_branch
        %601 = sbr.rel (%p599) target = $region60
      $region59: #{dual_rcnn_forward.1} parent=5 // pred_region
        %s602 = ssub.s32 %s19, 2
        // Predicated region
        $region61: #{dual_rcnn_forward.1} parent=59 // pred_check
          %p603 = pneg %p200
        $region62: #{dual_rcnn_forward.1} parent=59 // pred_check_branch
          %605 = sbr.rel (%p603) target = $region64
        $region63: #{dual_rcnn_forward.1} parent=59 // pred_region
          %p606 = scmp.lt.s32.totalorder %s25, 1
          %s607 = scalar_select %p606, %s25, 1
          %s608 = smul.addr %s607, 2
          %s609 = scalar_lea.vmem %s7, %s608
        $region64: #{dual_rcnn_forward.1} parent=59 // pred_fallthru
          _
        // Predicated region
        $region65: #{dual_rcnn_forward.1} parent=59 // pred_check
          %p610 = pneg %p226
        $region66: #{dual_rcnn_forward.1} parent=59 // pred_check_branch
          %612 = sbr.rel (%p610) target = $region68
        $region67: #{dual_rcnn_forward.1} parent=59 // pred_region
          %s613 = sand.u32 %s211, 1
          %s614 = scalar_lea.sflag [#allocation4], %s613
          %s615 = sand.u32 %s211, 1
          %s616 = scalar_lea.vmem [#allocation3], %s615
          %617 = dma.done %s614, 16
        $region68: #{dual_rcnn_forward.1} parent=59 // pred_fallthru
          _
      $region60: #{dual_rcnn_forward.1} parent=5 // pred_fallthru
        _
    $region6: #{dual_rcnn_forward.1} parent=1 // loop_footer
      %s23 = sadd.s32 1, %s19
    $region7: #{dual_rcnn_forward.1} parent=1 // loop_footer_branch
      %18 = sbr.rel target = $region3
    $region8: #{dual_rcnn_forward.1} parent=1 // loop_exit
      _
    %618 = vsyncpa [#allocation4], 1
    %s619 = scalar_lea.sflag [#allocation4], 1
    %620 = vsyncpa %s619, 1

</llo_original>
